<compile_context>
chip_gen: v6e
topology: v6e:2x2x1
jax: 0.10.0
libtpu: 0.0.40
codegen_flags: <defaults>
</compile_context>

<pallas_src>
import jax
import jax.numpy as jnp
from jax.experimental import pallas as pl
from jax.experimental.pallas import tpu as pltpu

# ----- model constants (from the module docstring) -----
NUM_TIME_FEATURES = 4
LEVEL_OF_SOC = 10
NUM_REACHABLE_HEX = 50
INPUT_DIM = NUM_TIME_FEATURES + LEVEL_OF_SOC + NUM_REACHABLE_HEX  # 64
OUTPUT_DIM = 8
H1 = 256
H2 = 64

DEFAULT_TB = 4096                    # batch tile (rows per grid step); sweep 2048-8192
VMEM_LIMIT_BYTES = 48 * 1024 * 1024  # covers large tiles; <= v7x 64 MiB/TC with headroom


def dqn_kernel(state_ref,
               w_fc_ref, b_fc_ref,
               w_h_ref, b_h_ref,
               w_head_ref, b_head_ref,
               q_ref):
    state = state_ref[...]                                     # (TB, 6) f32
    tb = state.shape[0]

    # ---- on-chip feature assembly: one iota over the 64 feature lanes ----
    # x layout (matches PyTorch cat order / w_fc row order):
    #   lanes 0..3   : time features (state[:, 2:6])
    #   lanes 4..13  : one_hot(soc)   (state[:, 1])
    #   lanes 14..63 : one_hot(hex)   (state[:, 0])
    hex_idx = state[:, 0:1].astype(jnp.int32)                  # (TB, 1)
    soc_idx = state[:, 1:2].astype(jnp.int32)                  # (TB, 1)
    lane = jax.lax.broadcasted_iota(jnp.int32, (tb, INPUT_DIM), 1)
    onehot = ((lane == soc_idx + NUM_TIME_FEATURES)
              | (lane == hex_idx + NUM_TIME_FEATURES + LEVEL_OF_SOC))
    x = onehot.astype(jnp.bfloat16)                            # (TB, 64) bf16
    for j in range(NUM_TIME_FEATURES):                         # drop time feats into lanes 0..3
        x = jnp.where(lane == j, state[:, 2 + j:3 + j].astype(jnp.bfloat16), x)

    # ---- fc layer: single K=64 bf16 matmul, f32 accumulate ----
    fc = jnp.dot(x, w_fc_ref[...], preferred_element_type=jnp.float32) + b_fc_ref[...]
    fc = jnp.maximum(fc, 0.0).astype(jnp.bfloat16)             # (TB, 256) bf16

    # ---- fused adv|v hidden layer: one (256,128) matmul ----
    h = jnp.dot(fc, w_h_ref[...], preferred_element_type=jnp.float32) + b_h_ref[...]
    h = jnp.maximum(h, 0.0).astype(jnp.bfloat16)               # (TB, 128) = [adv1 | v1]

    # ---- fused dueling head (mean-subtraction folded into weights) ----
    q_ref[...] = (jnp.dot(h, w_head_ref[...], preferred_element_type=jnp.float32)
                  + b_head_ref[...])                           # (TB, 8) f32


def dqn_forward(input_state, fused, tb=DEFAULT_TB):
    """input_state: (B, 6) float32 -> q_values: (B, OUTPUT_DIM) float32."""
    B, state_dim = input_state.shape
    tb = min(tb, B)
    grid_b = pl.cdiv(B, tb)
    Bp = grid_b * tb
    if Bp != B:                                # pad batch to a whole number of tiles
        input_state = jnp.pad(input_state, ((0, Bp - B), (0, 0)))

    weight_args = (fused["w_fc"], fused["b_fc"],
                   fused["w_h"], fused["b_h"],
                   fused["w_head"], fused["b_head"])

    # batch-streamed state; VMEM-resident weights (constant index_map)
    in_specs = [pl.BlockSpec((tb, state_dim), lambda i: (i, 0))]
    in_specs += [pl.BlockSpec(w.shape, lambda i: (0, 0)) for w in weight_args]

    q = pl.pallas_call(
        dqn_kernel,
        grid=(grid_b,),
        in_specs=in_specs,
        out_specs=pl.BlockSpec((tb, OUTPUT_DIM), lambda i: (i, 0)),
        out_shape=jax.ShapeDtypeStruct((Bp, OUTPUT_DIM), jnp.float32),
        compiler_params=pltpu.CompilerParams(
            dimension_semantics=("parallel",),     # megacore-shard batch where supported
            vmem_limit_bytes=VMEM_LIMIT_BYTES),
    )(input_state, *weight_args)
    return q[:B]


def init_params(key):
    """Deterministic init; weights stored as (in, out), biases as (1, out)."""
    ks = jax.random.split(key, 10)

    def linear(kw, kb, fan_in, fan_out):
        bound = 1.0 / jnp.sqrt(fan_in)
        w = jax.random.uniform(kw, (fan_in, fan_out), jnp.float32, -bound, bound)
        b = jax.random.uniform(kb, (1, fan_out), jnp.float32, -bound, bound)
        return w, b

    w_fc, b_fc = linear(ks[0], ks[1], INPUT_DIM, H1)
    w_adv, b_adv = linear(ks[2], ks[3], H1, H2)
    w_v, b_v = linear(ks[4], ks[5], H1, H2)
    w_oa, b_oa = linear(ks[6], ks[7], H2, OUTPUT_DIM)
    w_ov, b_ov = linear(ks[8], ks[9], H2, 1)
    return dict(w_fc=w_fc, b_fc=b_fc, w_adv=w_adv, b_adv=b_adv,
                w_v=w_v, b_v=b_v, w_oa=w_oa, b_oa=b_oa,
                w_ov=w_ov, b_ov=b_ov)


def fuse_params(p):
    """Host-side one-time fusion/cast of the PyTorch-layout params for the kernel."""
    # fc weight stays whole: rows [time(4) | soc(10) | hex(50)], bf16 for the MXU
    w_fc = p["w_fc"].astype(jnp.bfloat16)                                    # (64, 256)
    # fuse adv/v hidden branches into one 128-wide layer
    w_h = jnp.concatenate([p["w_adv"], p["w_v"]], axis=1).astype(jnp.bfloat16)  # (256, 128)
    b_h = jnp.concatenate([p["b_adv"], p["b_v"]], axis=1)                    # (1, 128) f32
    # fold dueling combine (q = v + adv - mean(adv)) into a single head matmul
    w_oa_c = p["w_oa"] - jnp.mean(p["w_oa"], axis=1, keepdims=True)          # (64, 8)
    b_oa_c = p["b_oa"] - jnp.mean(p["b_oa"], axis=1, keepdims=True)          # (1, 8)
    w_head = jnp.concatenate(
        [w_oa_c, jnp.tile(p["w_ov"], (1, OUTPUT_DIM))], axis=0).astype(jnp.bfloat16)  # (128, 8)
    b_head = b_oa_c + p["b_ov"]                                              # (1, 8) f32
    return dict(w_fc=w_fc, b_fc=p["b_fc"], w_h=w_h, b_h=b_h,
                w_head=w_head, b_head=b_head)


def _reference(state, p):
    """Plain-JAX f32 reference of the original (unfused) PyTorch forward."""
    oh_hex = jax.nn.one_hot(state[:, 0].astype(jnp.int32), NUM_REACHABLE_HEX)
    oh_soc = jax.nn.one_hot(state[:, 1].astype(jnp.int32), LEVEL_OF_SOC)
    x = jnp.concatenate([state[:, 2:], oh_soc, oh_hex], axis=1)
    fc = jnp.maximum(x @ p["w_fc"] + p["b_fc"], 0.0)
    a1 = jnp.maximum(fc @ p["w_adv"] + p["b_adv"], 0.0)
    v1 = jnp.maximum(fc @ p["w_v"] + p["b_v"], 0.0)
    adv = a1 @ p["w_oa"] + p["b_oa"]
    v = v1 @ p["w_ov"] + p["b_ov"]
    return v + adv - jnp.mean(adv, axis=1, keepdims=True)


def _make_inputs(key, B):
    kh, ks, kt = jax.random.split(key, 3)
    hex_id = jax.random.randint(kh, (B, 1), 0, NUM_REACHABLE_HEX).astype(jnp.float32)
    soc = jax.random.randint(ks, (B, 1), 0, LEVEL_OF_SOC).astype(jnp.float32)
    tfeat = jax.random.normal(kt, (B, NUM_TIME_FEATURES), dtype=jnp.float32)
    # column layout matches the PyTorch forward: [hex_id, soc, time features...]
    return jnp.concatenate([hex_id, soc, tfeat], axis=1)


if __name__ == "__main__":
    key = jax.random.PRNGKey(0)
    k_params, k_in1, k_in2 = jax.random.split(key, 3)

    params = init_params(k_params)
    fused = fuse_params(params)

    # bf16 matmul inputs (f32 accumulate) -> loosened tolerance vs f32 reference
    ATOL = 5e-2
    RTOL = 5e-2

    # primary small test: batch=2, single grid step
    state2 = _make_inputs(k_in1, 2)                       # (2, 6)
    q2 = dqn_forward(state2, fused)
    jax.block_until_ready(q2)
    assert jnp.allclose(q2, _reference(state2, params), atol=ATOL, rtol=RTOL), \
        "mismatch vs reference (B=2)"

    # gridded test: batch=40 with TB=16 -> grid of 3 steps, padded batch masked off
    state40 = _make_inputs(k_in2, 40)                     # (40, 6)
    q40 = dqn_forward(state40, fused, tb=16)
    jax.block_until_ready(q40)
    assert jnp.allclose(q40, _reference(state40, params), atol=ATOL, rtol=RTOL), \
        "mismatch vs reference (B=40, gridded)"

    print("KERNEL_OK")
</pallas_src>

<mosaic_0001>
module attributes {stable_mosaic.version = 11 : i64} {
  func.func @dqn_kernel(%arg0: i32, %arg1: memref<2x6xf32, #tpu.memory_space<vmem>>, %arg2: memref<64x256xbf16, #tpu.memory_space<vmem>>, %arg3: memref<1x256xf32, #tpu.memory_space<vmem>>, %arg4: memref<256x128xbf16, #tpu.memory_space<vmem>>, %arg5: memref<1x128xf32, #tpu.memory_space<vmem>>, %arg6: memref<128x8xbf16, #tpu.memory_space<vmem>>, %arg7: memref<1x8xf32, #tpu.memory_space<vmem>>, %arg8: memref<2x8xf32, #tpu.memory_space<vmem>>) attributes {dimension_semantics = [#tpu.dimension_semantics<parallel>], iteration_bounds = array<i64: 1>, scalar_prefetch = 0 : i64, scratch_operands = 0 : i64, tpu.core_type = #tpu.core_type<tc>, window_params = [{transform_indices = @transform_0, window_bounds = array<i64: 2, 6>}, {pipeline_mode = #tpu.pipeline_mode<synchronous>, transform_indices = @transform_1, window_bounds = array<i64: 64, 256>}, {pipeline_mode = #tpu.pipeline_mode<synchronous>, transform_indices = @transform_2, window_bounds = array<i64: 1, 256>}, {pipeline_mode = #tpu.pipeline_mode<synchronous>, transform_indices = @transform_3, window_bounds = array<i64: 256, 128>}, {pipeline_mode = #tpu.pipeline_mode<synchronous>, transform_indices = @transform_4, window_bounds = array<i64: 1, 128>}, {pipeline_mode = #tpu.pipeline_mode<synchronous>, transform_indices = @transform_5, window_bounds = array<i64: 128, 8>}, {pipeline_mode = #tpu.pipeline_mode<synchronous>, transform_indices = @transform_6, window_bounds = array<i64: 1, 8>}, {transform_indices = @transform_7, window_bounds = array<i64: 2, 8>}]} {
    %c0 = arith.constant 0 : index
    %c0_0 = arith.constant 0 : index
    %0 = vector.load %arg1[%c0, %c0_0] : memref<2x6xf32, #tpu.memory_space<vmem>>, vector<2x6xf32>
    %1 = vector.extract_strided_slice %0 {offsets = [0, 0], sizes = [2, 1], strides = [1, 1]} : vector<2x6xf32> to vector<2x1xf32>
    %2 = arith.fptosi %1 : vector<2x1xf32> to vector<2x1xi32>
    %3 = vector.extract_strided_slice %0 {offsets = [0, 1], sizes = [2, 1], strides = [1, 1]} : vector<2x6xf32> to vector<2x1xf32>
    %4 = arith.fptosi %3 : vector<2x1xf32> to vector<2x1xi32>
    %5 = tpu.iota {dimensions = array<i32: 1>} : vector<2x64xi32>
    %c4_i32 = arith.constant 4 : i32
    %6 = vector.broadcast %c4_i32 : i32 to vector<2x1xi32>
    %7 = arith.addi %4, %6 : vector<2x1xi32>
    %8 = vector.broadcast %7 : vector<2x1xi32> to vector<2x64xi32>
    %9 = arith.cmpi eq, %5, %8 : vector<2x64xi32>
    %c4_i32_1 = arith.constant 4 : i32
    %10 = vector.broadcast %c4_i32_1 : i32 to vector<2x1xi32>
    %11 = arith.addi %2, %10 : vector<2x1xi32>
    %c10_i32 = arith.constant 10 : i32
    %12 = vector.broadcast %c10_i32 : i32 to vector<2x1xi32>
    %13 = arith.addi %11, %12 : vector<2x1xi32>
    %14 = vector.broadcast %13 : vector<2x1xi32> to vector<2x64xi32>
    %15 = arith.cmpi eq, %5, %14 : vector<2x64xi32>
    %16 = arith.ori %9, %15 : vector<2x64xi1>
    %17 = arith.extui %16 : vector<2x64xi1> to vector<2x64xi32>
    %18 = arith.sitofp %17 : vector<2x64xi32> to vector<2x64xf32>
    %19 = arith.truncf %18 : vector<2x64xf32> to vector<2x64xbf16>
    %c0_i32 = arith.constant 0 : i32
    %20 = vector.broadcast %c0_i32 : i32 to vector<2x64xi32>
    %21 = arith.cmpi eq, %5, %20 : vector<2x64xi32>
    %22 = vector.extract_strided_slice %0 {offsets = [0, 2], sizes = [2, 1], strides = [1, 1]} : vector<2x6xf32> to vector<2x1xf32>
    %23 = arith.truncf %22 : vector<2x1xf32> to vector<2x1xbf16>
    %24 = vector.shape_cast %23 : vector<2x1xbf16> to vector<2x1xbf16>
    %25 = vector.broadcast %24 : vector<2x1xbf16> to vector<2x64xbf16>
    %26 = arith.select %21, %25, %19 : vector<2x64xi1>, vector<2x64xbf16>
    %c1_i32 = arith.constant 1 : i32
    %27 = vector.broadcast %c1_i32 : i32 to vector<2x64xi32>
    %28 = arith.cmpi eq, %5, %27 : vector<2x64xi32>
    %29 = vector.extract_strided_slice %0 {offsets = [0, 3], sizes = [2, 1], strides = [1, 1]} : vector<2x6xf32> to vector<2x1xf32>
    %30 = arith.truncf %29 : vector<2x1xf32> to vector<2x1xbf16>
    %31 = vector.shape_cast %30 : vector<2x1xbf16> to vector<2x1xbf16>
    %32 = vector.broadcast %31 : vector<2x1xbf16> to vector<2x64xbf16>
    %33 = arith.select %28, %32, %26 : vector<2x64xi1>, vector<2x64xbf16>
    %c2_i32 = arith.constant 2 : i32
    %34 = vector.broadcast %c2_i32 : i32 to vector<2x64xi32>
    %35 = arith.cmpi eq, %5, %34 : vector<2x64xi32>
    %36 = vector.extract_strided_slice %0 {offsets = [0, 4], sizes = [2, 1], strides = [1, 1]} : vector<2x6xf32> to vector<2x1xf32>
    %37 = arith.truncf %36 : vector<2x1xf32> to vector<2x1xbf16>
    %38 = vector.shape_cast %37 : vector<2x1xbf16> to vector<2x1xbf16>
    %39 = vector.broadcast %38 : vector<2x1xbf16> to vector<2x64xbf16>
    %40 = arith.select %35, %39, %33 : vector<2x64xi1>, vector<2x64xbf16>
    %c3_i32 = arith.constant 3 : i32
    %41 = vector.broadcast %c3_i32 : i32 to vector<2x64xi32>
    %42 = arith.cmpi eq, %5, %41 : vector<2x64xi32>
    %43 = vector.extract_strided_slice %0 {offsets = [0, 5], sizes = [2, 1], strides = [1, 1]} : vector<2x6xf32> to vector<2x1xf32>
    %44 = arith.truncf %43 : vector<2x1xf32> to vector<2x1xbf16>
    %45 = vector.shape_cast %44 : vector<2x1xbf16> to vector<2x1xbf16>
    %46 = vector.broadcast %45 : vector<2x1xbf16> to vector<2x64xbf16>
    %47 = arith.select %42, %46, %40 : vector<2x64xi1>, vector<2x64xbf16>
    %c0_2 = arith.constant 0 : index
    %c0_3 = arith.constant 0 : index
    %48 = vector.load %arg2[%c0_2, %c0_3] : memref<64x256xbf16, #tpu.memory_space<vmem>>, vector<64x256xbf16>
    %cst = arith.constant dense<0.000000e+00> : vector<2x256xf32>
    %49 = tpu.matmul %47, %48, %cst {dimension_numbers = #tpu.dot_dimension_numbers<[1], [0], [0], [1], [0, 0, 1, 1], [], []>} : vector<2x64xbf16>, vector<64x256xbf16>, vector<2x256xf32> -> vector<2x256xf32>
    %c0_4 = arith.constant 0 : index
    %c0_5 = arith.constant 0 : index
    %50 = vector.load %arg3[%c0_4, %c0_5] : memref<1x256xf32, #tpu.memory_space<vmem>>, vector<1x256xf32>
    %51 = vector.broadcast %50 : vector<1x256xf32> to vector<2x256xf32>
    %52 = arith.addf %49, %51 : vector<2x256xf32>
    %cst_6 = arith.constant 0.000000e+00 : f32
    %53 = vector.broadcast %cst_6 : f32 to vector<2x256xf32>
    %54 = arith.maximumf %52, %53 : vector<2x256xf32>
    %55 = arith.truncf %54 : vector<2x256xf32> to vector<2x256xbf16>
    %c0_7 = arith.constant 0 : index
    %c0_8 = arith.constant 0 : index
    %56 = vector.load %arg4[%c0_7, %c0_8] : memref<256x128xbf16, #tpu.memory_space<vmem>>, vector<256x128xbf16>
    %cst_9 = arith.constant dense<0.000000e+00> : vector<2x128xf32>
    %57 = tpu.matmul %55, %56, %cst_9 {dimension_numbers = #tpu.dot_dimension_numbers<[1], [0], [0], [1], [0, 0, 1, 1], [], []>} : vector<2x256xbf16>, vector<256x128xbf16>, vector<2x128xf32> -> vector<2x128xf32>
    %c0_10 = arith.constant 0 : index
    %c0_11 = arith.constant 0 : index
    %58 = vector.load %arg5[%c0_10, %c0_11] : memref<1x128xf32, #tpu.memory_space<vmem>>, vector<1x128xf32>
    %59 = vector.broadcast %58 : vector<1x128xf32> to vector<2x128xf32>
    %60 = arith.addf %57, %59 : vector<2x128xf32>
    %cst_12 = arith.constant 0.000000e+00 : f32
    %61 = vector.broadcast %cst_12 : f32 to vector<2x128xf32>
    %62 = arith.maximumf %60, %61 : vector<2x128xf32>
    %63 = arith.truncf %62 : vector<2x128xf32> to vector<2x128xbf16>
    %c0_13 = arith.constant 0 : index
    %c0_14 = arith.constant 0 : index
    %64 = vector.load %arg6[%c0_13, %c0_14] : memref<128x8xbf16, #tpu.memory_space<vmem>>, vector<128x8xbf16>
    %cst_15 = arith.constant dense<0.000000e+00> : vector<2x8xf32>
    %65 = tpu.matmul %63, %64, %cst_15 {dimension_numbers = #tpu.dot_dimension_numbers<[1], [0], [0], [1], [0, 0, 1, 1], [], []>} : vector<2x128xbf16>, vector<128x8xbf16>, vector<2x8xf32> -> vector<2x8xf32>
    %c0_16 = arith.constant 0 : index
    %c0_17 = arith.constant 0 : index
    %66 = vector.load %arg7[%c0_16, %c0_17] : memref<1x8xf32, #tpu.memory_space<vmem>>, vector<1x8xf32>
    %67 = vector.broadcast %66 : vector<1x8xf32> to vector<2x8xf32>
    %68 = arith.addf %65, %67 : vector<2x8xf32>
    %c0_18 = arith.constant 0 : index
    %c0_19 = arith.constant 0 : index
    %69 = vector.load %arg8[%c0_18, %c0_19] : memref<2x8xf32, #tpu.memory_space<vmem>>, vector<2x8xf32>
    tpu.vector_store %arg8[%c0_18, %c0_19], %68 {strides = array<i32>} : memref<2x8xf32, #tpu.memory_space<vmem>>, vector<2x8xf32>,
    return
  }
  func.func @transform_0(%arg0: i32) -> (i32, i32) {
    %c0_i32 = arith.constant 0 : i32
    %c0_i32_0 = arith.constant 0 : i32
    return %arg0, %c0_i32 : i32, i32
  }
  func.func @transform_1(%arg0: i32) -> (i32, i32) {
    %c0_i32 = arith.constant 0 : i32
    %c0_i32_0 = arith.constant 0 : i32
    %c0_i32_1 = arith.constant 0 : i32
    return %c0_i32, %c0_i32_0 : i32, i32
  }
  func.func @transform_2(%arg0: i32) -> (i32, i32) {
    %c0_i32 = arith.constant 0 : i32
    %c0_i32_0 = arith.constant 0 : i32
    %c0_i32_1 = arith.constant 0 : i32
    return %c0_i32, %c0_i32_0 : i32, i32
  }
  func.func @transform_3(%arg0: i32) -> (i32, i32) {
    %c0_i32 = arith.constant 0 : i32
    %c0_i32_0 = arith.constant 0 : i32
    %c0_i32_1 = arith.constant 0 : i32
    return %c0_i32, %c0_i32_0 : i32, i32
  }
  func.func @transform_4(%arg0: i32) -> (i32, i32) {
    %c0_i32 = arith.constant 0 : i32
    %c0_i32_0 = arith.constant 0 : i32
    %c0_i32_1 = arith.constant 0 : i32
    return %c0_i32, %c0_i32_0 : i32, i32
  }
  func.func @transform_5(%arg0: i32) -> (i32, i32) {
    %c0_i32 = arith.constant 0 : i32
    %c0_i32_0 = arith.constant 0 : i32
    %c0_i32_1 = arith.constant 0 : i32
    return %c0_i32, %c0_i32_0 : i32, i32
  }
  func.func @transform_6(%arg0: i32) -> (i32, i32) {
    %c0_i32 = arith.constant 0 : i32
    %c0_i32_0 = arith.constant 0 : i32
    %c0_i32_1 = arith.constant 0 : i32
    return %c0_i32, %c0_i32_0 : i32, i32
  }
  func.func @transform_7(%arg0: i32) -> (i32, i32) {
    %c0_i32 = arith.constant 0 : i32
    %c0_i32_0 = arith.constant 0 : i32
    return %arg0, %c0_i32 : i32, i32
  }
}

</mosaic_0001>

<llo_original>
// kernel: tpu_custom_call.1
$region0: #{tpu_custom_call.1}
  #allocation0 [shape = 'u32[]', space=smem, size = 0x4, offset = 0x4, fixed_abs, tag = 'smem constant byte address 0x4 - core index']
  #allocation1 [shape = 'u32[144,128]{1,0:T(1,128)}', space=vmem, size = 0x12000, scoped, tag = 'internal scratch']
  %s0 = inlined_call_operand.vmem [shape: f32[2,6], index: 0, kind: input, shape index: {}]
  %s1 = inlined_call_operand.vmem [shape: bf16[64,256], index: 1, kind: input, shape index: {}]
  %s2 = inlined_call_operand.vmem [shape: f32[1,256], index: 2, kind: input, shape index: {}]
  %s3 = inlined_call_operand.hbm [shape: bf16[256,128], index: 3, kind: input, shape index: {}]
  %s4 = inlined_call_operand.vmem [shape: f32[1,128], index: 4, kind: input, shape index: {}]
  %s5 = inlined_call_operand.vmem [shape: bf16[128,8], index: 5, kind: input, shape index: {}]
  %s6 = inlined_call_operand.vmem [shape: f32[1,8], index: 6, kind: input, shape index: {}]
  %s7 = inlined_call_operand.hbm [shape: f32[2,8], index: 7, kind: output, shape index: {}]
  %s8 = sld [smem:[#allocation0]]
  $region42: #{tpu_custom_call.1} parent=0
    _
  %s10 = ssub.s32 1, %s8
  %s11 = scalar_select 0, %s10, %s8
  $region1: #{tpu_custom_call.1} parent=0
    #allocation2 [shape = 'u8[65536]{0}', space=vmem, size = 0x10000, scoped, tag = 'input window, operand 3, single buffered']
    #allocation3 [shape = 's32[1]{0}', space=sflag, size = 0x4, scoped, tag = 'scoped memory for tpu_custom_call.1']
    #allocation4 [shape = 's32[1]{0}', space=sflag, size = 0x4, scoped, tag = 'scoped memory for tpu_custom_call.1']
    #allocation5 [shape = 'u8[1024]{0}', space=vmem, size = 0x400, scoped, tag = 'output window, operand 0, single buffered']
    %12 = vsyncpa [#allocation3], 0
    %13 = vsyncpa [#allocation4], 0
    // Predicated region
    $region2: #{tpu_custom_call.1} parent=1 // pred_check
      _
    $region3: #{tpu_custom_call.1} parent=1 // pred_check_branch
      %15 = sbr.rel (0) target = $region5
    $region4: #{tpu_custom_call.1} parent=1 // pred_region
      _
    $region5: #{tpu_custom_call.1} parent=1 // pred_fallthru
      _
    // Predicated region
    $region6: #{tpu_custom_call.1} parent=1 // pred_check
      _
    $region7: #{tpu_custom_call.1} parent=1 // pred_check_branch
      %17 = sbr.rel (0) target = $region9
    $region8: #{tpu_custom_call.1} parent=1 // pred_region
      _
    $region9: #{tpu_custom_call.1} parent=1 // pred_fallthru
      _
    // Predicated region
    $region10: #{tpu_custom_call.1} parent=1 // pred_check
      _
    $region11: #{tpu_custom_call.1} parent=1 // pred_check_branch
      %19 = sbr.rel (0) target = $region13
    $region12: #{tpu_custom_call.1} parent=1 // pred_region
      _
    $region13: #{tpu_custom_call.1} parent=1 // pred_fallthru
      _
    // Predicated region
    $region14: #{tpu_custom_call.1} parent=1 // pred_check
      _
    $region15: #{tpu_custom_call.1} parent=1 // pred_check_branch
      %21 = sbr.rel (0) target = $region17
    $region16: #{tpu_custom_call.1} parent=1 // pred_region
      %s23 = ssub.s32 2048, 2048
      %24 = vsyncadd [#allocation3], %s23
      %s25 = sshll.u32 [#allocation2], 4
      %s26 = int_to_ptr.vmem [resolvable:$true] %s25
      %31 = dma.hbm_to_vmem [thread:$0]  %s3, 2048, %s26, [#allocation3], 64, 64, 4
    $region17: #{tpu_custom_call.1} parent=1 // pred_fallthru
      _
    // Predicated region
    $region18: #{tpu_custom_call.1} parent=1 // pred_check
      _
    $region19: #{tpu_custom_call.1} parent=1 // pred_check_branch
      %33 = sbr.rel (0) target = $region21
    $region20: #{tpu_custom_call.1} parent=1 // pred_region
      _
    $region21: #{tpu_custom_call.1} parent=1 // pred_fallthru
      _
    // Predicated region
    $region22: #{tpu_custom_call.1} parent=1 // pred_check
      _
    $region23: #{tpu_custom_call.1} parent=1 // pred_check_branch
      %35 = sbr.rel (0) target = $region25
    $region24: #{tpu_custom_call.1} parent=1 // pred_region
      _
    $region25: #{tpu_custom_call.1} parent=1 // pred_fallthru
      _
    // Predicated region
    $region26: #{tpu_custom_call.1} parent=1 // pred_check
      _
    $region27: #{tpu_custom_call.1} parent=1 // pred_check_branch
      %37 = sbr.rel (0) target = $region29
    $region28: #{tpu_custom_call.1} parent=1 // pred_region
      _
    $region29: #{tpu_custom_call.1} parent=1 // pred_fallthru
      _
    // Predicated region
    $region30: #{tpu_custom_call.1} parent=1 // pred_check
      _
    $region31: #{tpu_custom_call.1} parent=1 // pred_check_branch
      %39 = sbr.rel (0) target = $region33
    $region32: #{tpu_custom_call.1} parent=1 // pred_region
      %40 = dma.done [#allocation3], 2048
    $region33: #{tpu_custom_call.1} parent=1 // pred_fallthru
      _
    %v42 = vld [vmem:[%s0] sm:$0x3]
    %v43 = vcvt.f32.s32.to.zero.pseudo %v42
    %v44 = vlaneseq
    %v45 = vand.u32 %v44, 127
    %v46 = vadd.s32 %v43, 4
    %47 = vset.pattern.permute.xlu0 1
    %48 = vperm.xlu0 %47, %v46
    %v49 = vpop.permute.xlu0 %48
    %vm50 = vcmp.eq.s32.totalorder %v45, %v49
    %v51 = vadd.s32 %v46, 10
    %52 = vset.pattern.permute.xlu0 0
    %53 = vperm.xlu0 %52, %v51
    %v54 = vpop.permute.xlu0 %53
    %vm55 = vcmp.eq.s32.totalorder %v45, %v54
    %vm56 = vmor %vm50, %vm55
    %v57 = vsel %vm56, 1, 0
    %v58 = vcvt.s32.f32 %v57
    %v59 = vpack.c.bf16 %v58, %v58
    %vm60 = vcmp.eq.s32.totalorder %v45, 0
    %v61 = vpack.c.bf16 %v42, %v42
    %63 = vset.pattern.permute.xlu0 2
    %64 = vperm.xlu0 %63, %v61
    %v65 = vpop.permute.xlu0 %64
    %vm67 = vmpackc.low %vm60, %vm60
    %v68 = vsel %vm67, %v65, %v59
    %vm69 = vcmp.eq.s32.totalorder %v45, 1
    %70 = vset.pattern.permute.xlu0 3
    %71 = vperm.xlu0 %70, %v61
    %v72 = vpop.permute.xlu0 %71
    %vm74 = vmpackc.low %vm69, %vm69
    %v75 = vsel %vm74, %v72, %v68
    %vm76 = vcmp.eq.s32.totalorder %v45, 2
    %77 = vset.pattern.permute.xlu0 4
    %78 = vperm.xlu0 %77, %v61
    %v79 = vpop.permute.xlu0 %78
    %vm81 = vmpackc.low %vm76, %vm76
    %v82 = vsel %vm81, %v79, %v75
    %vm83 = vcmp.eq.s32.totalorder %v45, 3
    %84 = vset.pattern.permute.xlu0 5
    %85 = vperm.xlu0 %84, %v61
    %v86 = vpop.permute.xlu0 %85
    %vm88 = vmpackc.low %vm83, %vm83
    %v89 = vsel %vm88, %v86, %v82
    %v90 = vld [vmem:[%s1] sm:$0xff]
    %v91 = vld [vmem:[%s1 + $0x8] sm:$0xff]
    %v92 = vld [vmem:[%s1 + $0x10] sm:$0xff]
    %v93 = vld [vmem:[%s1 + $0x18] sm:$0xff]
    %v94 = vld [vmem:[%s1 + $0x20] sm:$0xff]
    %v95 = vld [vmem:[%s1 + $0x28] sm:$0xff]
    %v96 = vld [vmem:[%s1 + $0x30] sm:$0xff]
    %v97 = vld [vmem:[%s1 + $0x38] sm:$0xff]
    %v98 = vld [vmem:[%s2] sm:$0x3]
    %v100 = vlaneseq
    %v101 = vshrl.u32 %v100, 7
    %v102 = vsub.s32 0, %v101
    %v103 = vrot.slane %v98, %v102
    %v104 = vlaneseq
    %v105 = vshrl.u32 %v104, 7
    %v106 = vsub.s32 1, %v105
    %v107 = vrot.slane %v98, %v106
    %v118 = vunpack.c.l.b16 %v90
    %v119 = vunpack.c.h.b16 %v90
    %v120 = vunpack.c.l.b16 %v91
    %v121 = vunpack.c.h.b16 %v91
    %v122 = vunpack.c.l.b16 %v92
    %v123 = vunpack.c.h.b16 %v92
    %v124 = vunpack.c.l.b16 %v93
    %v125 = vunpack.c.h.b16 %v93
    %v126 = vunpack.c.l.b16 %v94
    %v127 = vunpack.c.h.b16 %v94
    %v128 = vunpack.c.l.b16 %v95
    %v129 = vunpack.c.h.b16 %v95
    %v130 = vunpack.c.l.b16 %v96
    %v131 = vunpack.c.h.b16 %v96
    %v132 = vunpack.c.l.b16 %v97
    %v133 = vunpack.c.h.b16 %v97
    %v134 = vpack.c.b16 %v120, %v118
    %v135 = vpack.c.b16 %v121, %v119
    %v136 = vpack.c.b16 %v124, %v122
    %v137 = vpack.c.b16 %v125, %v123
    %v138 = vpack.c.b16 %v128, %v126
    %v139 = vpack.c.b16 %v129, %v127
    %v140 = vpack.c.b16 %v132, %v130
    %v141 = vpack.c.b16 %v133, %v131
    %vm150 = vcmask 523264
    %v152 = vsel %vm150, %v89, 0
    %154 = vmatprep.subr.bf16.mxu0 0
    %155 = vmatpush1.bf16.msra.mxu0 0
    %156 = vmatprep.subr.bf16.mxu0 0
    %157 = vmatpush1.bf16.msra.mxu0 0
    %158 = vmatprep.subr.bf16.mxu0 0
    %159 = vmatpush1.bf16.msra.mxu0 0
    %160 = vmatprep.subr.bf16.mxu0 0
    %161 = vmatpush1.bf16.msra.mxu0 0
    %162 = vmatprep.subr.bf16.mxu0 %v141
    %163 = vmatpush1.bf16.msra.mxu0 %v140
    %164 = vmatprep.subr.bf16.mxu0 %v139
    %165 = vmatpush1.bf16.msra.mxu0 %v138
    %166 = vmatprep.subr.bf16.mxu0 %v137
    %167 = vmatpush1.bf16.msra.mxu0 %v136
    %168 = vmatprep.subr.bf16.mxu0 %v135
    %169 = vmatpush1.bf16.msra.mxu0 %v134
    %170 = vmatprep.subr.bf16.mxu0 0
    %171 = vmatpush2.bf16.msra.mxu0 0
    %172 = vmatprep.subr.bf16.mxu0 0
    %173 = vmatpush2.bf16.msra.mxu0 0
    %174 = vmatprep.subr.bf16.mxu0 0
    %175 = vmatpush2.bf16.msra.mxu0 0
    %176 = vmatprep.subr.bf16.mxu0 0
    %177 = vmatpush2.bf16.msra.mxu0 0
    %178 = vmatprep.subr.bf16.mxu0 0
    %179 = vmatpush2.bf16.msra.mxu0 0
    %180 = vmatprep.subr.bf16.mxu0 0
    %181 = vmatpush2.bf16.msra.mxu0 0
    %182 = vmatprep.subr.bf16.mxu0 0
    %183 = vmatpush2.bf16.msra.mxu0 0
    %184 = vmatprep.subr.bf16.mxu0 0
    %185 = vmatpush2.bf16.msra.mxu0 0
    %186 = vmatprep.mubr.bf16.mxu0 0
    %187 = vmatmul.mubr.bf16.gmra.mxu0 %v152
    %v188 = vpop.f32.mrf.mxu0
    %v189 = vadd.f32 %v103, %v188
    %v190 = vpop.f32.mrf.mxu0
    %v191 = vadd.f32 %v107, %v190
    %v192 = vpop.f32.mrf.mxu0
    %v193 = vpop.f32.mrf.mxu0
    %194 = vdwg.mxu0
    %v195 = vmax.f32 %v189, 0.0
    %v196 = vmax.f32 %v191, 0.0
    %v197 = vpack.c.bf16 %v195, %v195
    %v198 = vpack.c.bf16 %v196, %v196
    %v199 = vld [vmem:[#allocation2] sm:$0xf]
    %v200 = vld [vmem:[#allocation2 + $0x4] sm:$0xf]
    %v201 = vld [vmem:[#allocation2 + $0x8] sm:$0xf]
    %v202 = vld [vmem:[#allocation2 + $0xc] sm:$0xf]
    %v203 = vld [vmem:[#allocation2 + $0x10] sm:$0xf]
    %v204 = vld [vmem:[#allocation2 + $0x14] sm:$0xf]
    %v205 = vld [vmem:[#allocation2 + $0x18] sm:$0xf]
    %v206 = vld [vmem:[#allocation2 + $0x1c] sm:$0xf]
    %v207 = vld [vmem:[#allocation2 + $0x20] sm:$0xf]
    %v208 = vld [vmem:[#allocation2 + $0x24] sm:$0xf]
    %v209 = vld [vmem:[#allocation2 + $0x28] sm:$0xf]
    %v210 = vld [vmem:[#allocation2 + $0x2c] sm:$0xf]
    %v211 = vld [vmem:[#allocation2 + $0x30] sm:$0xf]
    %v212 = vld [vmem:[#allocation2 + $0x34] sm:$0xf]
    %v213 = vld [vmem:[#allocation2 + $0x38] sm:$0xf]
    %v214 = vld [vmem:[#allocation2 + $0x3c] sm:$0xf]
    %v215 = vld [vmem:[#allocation2 + $0x40] sm:$0xf]
    %v216 = vld [vmem:[#allocation2 + $0x44] sm:$0xf]
    %v217 = vld [vmem:[#allocation2 + $0x48] sm:$0xf]
    %v218 = vld [vmem:[#allocation2 + $0x4c] sm:$0xf]
    %v219 = vld [vmem:[#allocation2 + $0x50] sm:$0xf]
    %v220 = vld [vmem:[#allocation2 + $0x54] sm:$0xf]
    %v221 = vld [vmem:[#allocation2 + $0x58] sm:$0xf]
    %v222 = vld [vmem:[#allocation2 + $0x5c] sm:$0xf]
    %v223 = vld [vmem:[#allocation2 + $0x60] sm:$0xf]
    %v224 = vld [vmem:[#allocation2 + $0x64] sm:$0xf]
    %v225 = vld [vmem:[#allocation2 + $0x68] sm:$0xf]
    %v226 = vld [vmem:[#allocation2 + $0x6c] sm:$0xf]
    %v227 = vld [vmem:[#allocation2 + $0x70] sm:$0xf]
    %v228 = vld [vmem:[#allocation2 + $0x74] sm:$0xf]
    %v229 = vld [vmem:[#allocation2 + $0x78] sm:$0xf]
    %v230 = vld [vmem:[#allocation2 + $0x7c] sm:$0xf]
    %v231 = vld [vmem:[%s4] sm:$0x1]
    %v233 = vlaneseq
    %v234 = vshrl.u32 %v233, 7
    %v235 = vsub.s32 0, %v234
    %v236 = vrot.slane %v231, %v235
    %v270 = vunpack.c.l.b16 %v199
    %v271 = vunpack.c.l.b16 %v200
    %v272 = vunpack.c.l.b16 %v201
    %v273 = vunpack.c.l.b16 %v202
    %v274 = vunpack.c.l.b16 %v203
    %v275 = vunpack.c.l.b16 %v204
    %v276 = vunpack.c.l.b16 %v205
    %v277 = vunpack.c.l.b16 %v206
    %v278 = vunpack.c.l.b16 %v207
    %v279 = vunpack.c.l.b16 %v208
    %v280 = vunpack.c.l.b16 %v209
    %v281 = vunpack.c.l.b16 %v210
    %v282 = vunpack.c.l.b16 %v211
    %v283 = vunpack.c.l.b16 %v212
    %v284 = vunpack.c.l.b16 %v213
    %v285 = vunpack.c.l.b16 %v214
    %v286 = vunpack.c.l.b16 %v215
    %v287 = vunpack.c.l.b16 %v216
    %v288 = vunpack.c.l.b16 %v217
    %v289 = vunpack.c.l.b16 %v218
    %v290 = vunpack.c.l.b16 %v219
    %v291 = vunpack.c.l.b16 %v220
    %v292 = vunpack.c.l.b16 %v221
    %v293 = vunpack.c.l.b16 %v222
    %v294 = vunpack.c.l.b16 %v223
    %v295 = vunpack.c.l.b16 %v224
    %v296 = vunpack.c.l.b16 %v225
    %v297 = vunpack.c.l.b16 %v226
    %v298 = vunpack.c.l.b16 %v227
    %v299 = vunpack.c.l.b16 %v228
    %v300 = vunpack.c.l.b16 %v229
    %v301 = vunpack.c.l.b16 %v230
    %v302 = vpack.c.b16 %v271, %v270
    %v303 = vpack.c.b16 %v273, %v272
    %v304 = vpack.c.b16 %v275, %v274
    %v305 = vpack.c.b16 %v277, %v276
    %v306 = vpack.c.b16 %v279, %v278
    %v307 = vpack.c.b16 %v281, %v280
    %v308 = vpack.c.b16 %v283, %v282
    %v309 = vpack.c.b16 %v285, %v284
    %v310 = vpack.c.b16 %v287, %v286
    %v311 = vpack.c.b16 %v289, %v288
    %v312 = vpack.c.b16 %v291, %v290
    %v313 = vpack.c.b16 %v293, %v292
    %v314 = vpack.c.b16 %v295, %v294
    %v315 = vpack.c.b16 %v297, %v296
    %v316 = vpack.c.b16 %v299, %v298
    %v317 = vpack.c.b16 %v301, %v300
    %334 = vmatprep.subr.bf16.mxu0 0
    %335 = vmatpush1.bf16.msra.mxu0 %v309
    %336 = vmatprep.subr.bf16.mxu0 0
    %337 = vmatpush1.bf16.msra.mxu0 %v308
    %338 = vmatprep.subr.bf16.mxu0 0
    %339 = vmatpush1.bf16.msra.mxu0 %v307
    %340 = vmatprep.subr.bf16.mxu0 0
    %341 = vmatpush1.bf16.msra.mxu0 %v306
    %342 = vmatprep.subr.bf16.mxu0 0
    %343 = vmatpush1.bf16.msra.mxu0 %v305
    %344 = vmatprep.subr.bf16.mxu0 0
    %345 = vmatpush1.bf16.msra.mxu0 %v304
    %346 = vmatprep.subr.bf16.mxu0 0
    %347 = vmatpush1.bf16.msra.mxu0 %v303
    %348 = vmatprep.subr.bf16.mxu0 0
    %349 = vmatpush1.bf16.msra.mxu0 %v302
    %350 = vmatprep.subr.bf16.mxu0 0
    %351 = vmatpush2.bf16.msra.mxu0 %v317
    %352 = vmatprep.subr.bf16.mxu0 0
    %353 = vmatpush2.bf16.msra.mxu0 %v316
    %354 = vmatprep.subr.bf16.mxu0 0
    %355 = vmatpush2.bf16.msra.mxu0 %v315
    %356 = vmatprep.subr.bf16.mxu0 0
    %357 = vmatpush2.bf16.msra.mxu0 %v314
    %358 = vmatprep.subr.bf16.mxu0 0
    %359 = vmatpush2.bf16.msra.mxu0 %v313
    %360 = vmatprep.subr.bf16.mxu0 0
    %361 = vmatpush2.bf16.msra.mxu0 %v312
    %362 = vmatprep.subr.bf16.mxu0 0
    %363 = vmatpush2.bf16.msra.mxu0 %v311
    %364 = vmatprep.subr.bf16.mxu0 0
    %365 = vmatpush2.bf16.msra.mxu0 %v310
    %366 = vmatprep.mubr.bf16.mxu0 %v198
    %367 = vmatmul.mubr.bf16.gmra.mxu0 %v197
    %v368 = vpop.f32.mrf.mxu0
    %v369 = vadd.f32 %v236, %v368
    %v370 = vpop.f32.mrf.mxu0
    %v371 = vpop.f32.mrf.mxu0
    %v372 = vpop.f32.mrf.mxu0
    %373 = vdwg.mxu0
    %v374 = vmax.f32 %v369, 0.0
    %v375 = vpack.c.bf16 %v374, %v374
    %v376 = vld [vmem:[%s5] sm:$0xf]
    %v377 = vld [vmem:[%s5 + $0x4] sm:$0xf]
    %v378 = vld [vmem:[%s5 + $0x8] sm:$0xf]
    %v379 = vld [vmem:[%s5 + $0xc] sm:$0xf]
    %v380 = vld [vmem:[%s5 + $0x10] sm:$0xf]
    %v381 = vld [vmem:[%s5 + $0x14] sm:$0xf]
    %v382 = vld [vmem:[%s5 + $0x18] sm:$0xf]
    %v383 = vld [vmem:[%s5 + $0x1c] sm:$0xf]
    %v384 = vld [vmem:[%s5 + $0x20] sm:$0xf]
    %v385 = vld [vmem:[%s5 + $0x24] sm:$0xf]
    %v386 = vld [vmem:[%s5 + $0x28] sm:$0xf]
    %v387 = vld [vmem:[%s5 + $0x2c] sm:$0xf]
    %v388 = vld [vmem:[%s5 + $0x30] sm:$0xf]
    %v389 = vld [vmem:[%s5 + $0x34] sm:$0xf]
    %v390 = vld [vmem:[%s5 + $0x38] sm:$0xf]
    %v391 = vld [vmem:[%s5 + $0x3c] sm:$0xf]
    %v392 = vld [vmem:[%s6] sm:$0x1]
    %v394 = vlaneseq
    %v395 = vshrl.u32 %v394, 7
    %v396 = vsub.s32 0, %v395
    %v397 = vrot.slane %v392, %v396
    %v415 = vunpack.c.l.b16 %v376
    %v416 = vunpack.c.l.b16 %v377
    %v417 = vunpack.c.l.b16 %v378
    %v418 = vunpack.c.l.b16 %v379
    %v419 = vunpack.c.l.b16 %v380
    %v420 = vunpack.c.l.b16 %v381
    %v421 = vunpack.c.l.b16 %v382
    %v422 = vunpack.c.l.b16 %v383
    %v423 = vunpack.c.l.b16 %v384
    %v424 = vunpack.c.l.b16 %v385
    %v425 = vunpack.c.l.b16 %v386
    %v426 = vunpack.c.l.b16 %v387
    %v427 = vunpack.c.l.b16 %v388
    %v428 = vunpack.c.l.b16 %v389
    %v429 = vunpack.c.l.b16 %v390
    %v430 = vunpack.c.l.b16 %v391
    %v431 = vpack.c.b16 %v416, %v415
    %v432 = vpack.c.b16 %v418, %v417
    %v433 = vpack.c.b16 %v420, %v419
    %v434 = vpack.c.b16 %v422, %v421
    %v435 = vpack.c.b16 %v424, %v423
    %v436 = vpack.c.b16 %v426, %v425
    %v437 = vpack.c.b16 %v428, %v427
    %v438 = vpack.c.b16 %v430, %v429
    %447 = vmatprep.subr.bf16.mxu0 0
    %448 = vmatpush1.bf16.msra.mxu0 %v438
    %449 = vmatprep.subr.bf16.mxu0 0
    %450 = vmatpush1.bf16.msra.mxu0 %v437
    %451 = vmatprep.subr.bf16.mxu0 0
    %452 = vmatpush1.bf16.msra.mxu0 %v436
    %453 = vmatprep.subr.bf16.mxu0 0
    %454 = vmatpush1.bf16.msra.mxu0 %v435
    %455 = vmatprep.subr.bf16.mxu0 0
    %456 = vmatpush1.bf16.msra.mxu0 %v434
    %457 = vmatprep.subr.bf16.mxu0 0
    %458 = vmatpush1.bf16.msra.mxu0 %v433
    %459 = vmatprep.subr.bf16.mxu0 0
    %460 = vmatpush1.bf16.msra.mxu0 %v432
    %461 = vmatprep.subr.bf16.mxu0 0
    %462 = vmatpush1.bf16.msra.mxu0 %v431
    %463 = vmatprep.subr.bf16.mxu0 0
    %464 = vmatpush2.bf16.msra.mxu0 0
    %465 = vmatprep.subr.bf16.mxu0 0
    %466 = vmatpush2.bf16.msra.mxu0 0
    %467 = vmatprep.subr.bf16.mxu0 0
    %468 = vmatpush2.bf16.msra.mxu0 0
    %469 = vmatprep.subr.bf16.mxu0 0
    %470 = vmatpush2.bf16.msra.mxu0 0
    %471 = vmatprep.subr.bf16.mxu0 0
    %472 = vmatpush2.bf16.msra.mxu0 0
    %473 = vmatprep.subr.bf16.mxu0 0
    %474 = vmatpush2.bf16.msra.mxu0 0
    %475 = vmatprep.subr.bf16.mxu0 0
    %476 = vmatpush2.bf16.msra.mxu0 0
    %477 = vmatprep.subr.bf16.mxu0 0
    %478 = vmatpush2.bf16.msra.mxu0 0
    %479 = vmatprep.mubr.bf16.mxu0 0
    %480 = vmatmul.mubr.bf16.gmra.mxu0 %v375
    %v481 = vpop.f32.mrf.mxu0
    %v482 = vadd.f32 %v397, %v481
    %v483 = vpop.f32.mrf.mxu0
    %v484 = vpop.f32.mrf.mxu0
    %v485 = vpop.f32.mrf.mxu0
    %486 = vdwg.mxu0
    %vm487 = vcmask 58368
    %488 = vst.msk [vmem:[#allocation5] sm:$0x3] %vm487, %v482
    // Predicated region
    $region34: #{tpu_custom_call.1} parent=1 // pred_check
      _
    $region35: #{tpu_custom_call.1} parent=1 // pred_check_branch
      %490 = sbr.rel (0) target = $region37
    $region36: #{tpu_custom_call.1} parent=1 // pred_region
      %s492 = ssub.s32 32, 32
      %493 = vsyncadd [#allocation4], %s492
      %s495 = sshll.u32 [#allocation5], 4
      %s496 = int_to_ptr.vmem [resolvable:$true] %s495
      %498 = dma.vmem_to_hbm [thread:$0]  %s496, 32, %s7, [#allocation4]
    $region37: #{tpu_custom_call.1} parent=1 // pred_fallthru
      _
    // Predicated region
    $region38: #{tpu_custom_call.1} parent=1 // pred_check
      _
    $region39: #{tpu_custom_call.1} parent=1 // pred_check_branch
      %500 = sbr.rel (0) target = $region41
    $region40: #{tpu_custom_call.1} parent=1 // pred_region
      %501 = dma.done [#allocation4], 32
    $region41: #{tpu_custom_call.1} parent=1 // pred_fallthru
      _
    %502 = vsyncpa [#allocation3], 1
    %503 = vsyncpa [#allocation4], 1

</llo_original>
